<compile_context>
chip_gen: v6e
topology: v6e:2x2x1
jax: 0.10.0
libtpu: 0.0.40
codegen_flags: <defaults>
</compile_context>

<pallas_src>
import jax
import jax.numpy as jnp
from jax import lax
from jax.experimental import pallas as pl
from jax.experimental.pallas import tpu as pltpu

TAU = 0.2
_EPS = 1e-12  # torch.nn.functional.normalize eps


def _device_kind():
    try:
        return jax.devices()[0].device_kind.lower()
    except Exception:
        return ""


def _has_bf16_eup():
    # v6e / v7x have a bf16 EUP + VPU; v5e and older do not.
    kind = _device_kind()
    return not any(tag in kind for tag in ("v2", "v3", "v4", "v5"))


def _vmem_capacity_bytes():
    try:
        return int(pltpu.get_tpu_info().vmem_capacity_bytes)
    except Exception:
        return 64 << 20  # conservative fallback (v7x per-TC VMEM)


def _choose_tiles(n, d, mm_itemsize, budget):
    """Pick (TM, TN, est_bytes).

    Block dims must be multiples of 8 (sublane) unless they equal the full
    array extent; the working set is O(TM*D + TN*D + TM*TN), independent of N.
    """
    def est(tm, tn):
        row = 2 * 2 * tm * d * mm_itemsize   # 2 row-block inputs, double-buffered
        col = 2 * 2 * tn * d * mm_itemsize   # 2 col-block inputs, double-buffered
        tmp = 4 * tm * tn * 4                # (TM,TN) f32 sim/exp temporaries (conservative)
        small = 6 * tm * 4                   # accumulators + output block
        return row + col + tmp + small

    if n <= 8:
        return n, n, est(n, n)
    cands = [c for c in (512, 256, 128, 64, 32, 16, 8) if c <= n]
    for tm in cands:            # favor a tall TM first (MXU M utilization)
        for tn in cands:
            if est(tm, tn) <= budget:
                return tm, tn, est(tm, tn)
    tm = tn = cands[-1]
    return tm, tn, est(tm, tn)


def _make_kernel(n, tn, gc, exp_dtype, needs_col_mask):
    def kernel(a1r_ref, a2r_ref, a1c_ref, a2c_ref, out_ref, s1_acc, s2_acc):
        c = pl.program_id(1)

        @pl.when(c == 0)
        def _():
            s1_acc[...] = jnp.zeros_like(s1_acc)
            s2_acc[...] = jnp.zeros_like(s2_acc)

        dn = (((1,), (1,)), ((), ()))  # contract the lane (feature) axis of both operands

        if needs_col_mask:  # static: only emitted when the last column block is partial
            col = c * tn + lax.broadcasted_iota(jnp.int32, (1, tn), 1)
            valid = col < n

        # --- direction 1: anchor = h1 rows, sample = h2 columns --------------
        # (the 1/tau scale is folded into the h1-side operand by the wrapper)
        sim1 = lax.dot_general(a1r_ref[...], a2c_ref[...], dimension_numbers=dn,
                               preferred_element_type=jnp.float32)        # (TM, TN)
        # L2-normalized operands with tau = 0.2 => |sim| <= 5, so exp() is
        # always finite in f32 and the LSE needs no max-subtraction.
        p1 = jnp.exp(sim1.astype(exp_dtype)).astype(jnp.float32)
        if needs_col_mask:
            p1 = jnp.where(valid, p1, 0.0)
        s1_acc[...] += jnp.sum(p1, axis=-1, keepdims=True)

        # --- direction 2: anchor = h2 rows, sample = h1 columns --------------
        # (computed after direction 1 so only one (TM,TN) temporary set is live)
        sim2 = lax.dot_general(a2r_ref[...], a1c_ref[...], dimension_numbers=dn,
                               preferred_element_type=jnp.float32)        # (TM, TN)
        p2 = jnp.exp(sim2.astype(exp_dtype)).astype(jnp.float32)
        if needs_col_mask:
            p2 = jnp.where(valid, p2, 0.0)
        s2_acc[...] += jnp.sum(p2, axis=-1, keepdims=True)

        @pl.when(c == gc - 1)
        def _():
            # Padded rows of a partial edge row-block hold garbage here, but
            # Pallas writes back only the in-range rows of the output block.
            out_ref[...] = jnp.log(s1_acc[...]) + jnp.log(s2_acc[...])

    return kernel


def _l2_normalize_f32(x):
    # F.normalize semantics: x / max(||x||, eps), via rsqrt with an eps^2 clamp.
    x = x.astype(jnp.float32)
    ss = jnp.sum(x * x, axis=-1, keepdims=True)
    return x * lax.rsqrt(jnp.maximum(ss, jnp.float32(_EPS * _EPS)))


def yate_contrast_cl(h1, h2, *, tau=TAU, use_bf16_matmul=True):
    """forward(h1, h2) of YATE_Contrast_CL with an InfoNCE loss (see header)."""
    assert h1.shape == h2.shape and h1.ndim == 2
    # The no-max-shift LSE inside the kernel requires exp(1/tau) to be finite in f32.
    assert tau > 1.0 / 80.0, "tau too small for the unshifted LSE kernel"
    n, d = h1.shape
    inv_tau = jnp.float32(1.0 / tau)

    # ---- O(N*D) prep, hoisted out of the kernel (full f32 precision) --------
    n1 = _l2_normalize_f32(h1)
    n2 = _l2_normalize_f32(h2)
    # Positive pairs: sim1[i,i] == sim2[i,i]; kept in f32 outside the kernel.
    diag_mean = jnp.mean(jnp.sum(n1 * n2, axis=-1)) * inv_tau

    in_bf16 = (h1.dtype == jnp.bfloat16) or (h2.dtype == jnp.bfloat16)
    mm_dtype = jnp.bfloat16 if (use_bf16_matmul or in_bf16) else jnp.float32
    exp_dtype = (jnp.bfloat16 if (mm_dtype == jnp.bfloat16 and _has_bf16_eup())
                 else jnp.float32)

    a1 = (n1 * inv_tau).astype(mm_dtype)   # h1 side (anchor dir-1 / sample dir-2), carries 1/tau
    a2 = n2.astype(mm_dtype)               # h2 side (anchor dir-2 / sample dir-1)

    # ---- generation-aware tiling / VMEM sizing -------------------------------
    mm_itemsize = jnp.dtype(mm_dtype).itemsize
    phys_vmem = _vmem_capacity_bytes()
    budget = min(phys_vmem // 2, 48 << 20)        # ~32 MiB on v7x, 48 MiB on v5e/v6e
    tm, tn, est = _choose_tiles(n, d, mm_itemsize, budget)
    gr, gc = pl.cdiv(n, tm), pl.cdiv(n, tn)
    needs_col_mask = (n % tn) != 0
    vmem_limit = int(min(max(32 << 20, int(1.3 * est)), phys_vmem - (4 << 20)))

    cost = pl.CostEstimate(
        flops=int(4 * n * n * d),
        transcendentals=int(2 * n * n),
        bytes_accessed=int((2 * n * d + 2 * gr * n * d) * mm_itemsize + 4 * n),
    )

    kernel = _make_kernel(n, tn, gc, exp_dtype, needs_col_mask)

    # lse_sum[i] = log(sum_j exp(sim1[i, j])) + log(sum_j exp(sim2[i, j]))
    lse_sum = pl.pallas_call(
        kernel,
        out_shape=jax.ShapeDtypeStruct((n, 1), jnp.float32),
        grid=(gr, gc),
        in_specs=[
            pl.BlockSpec((tm, d), lambda r, c: (r, 0)),  # h1 rows (anchor, dir 1)
            pl.BlockSpec((tm, d), lambda r, c: (r, 0)),  # h2 rows (anchor, dir 2)
            pl.BlockSpec((tn, d), lambda r, c: (c, 0)),  # h1 cols (sample, dir 2)
            pl.BlockSpec((tn, d), lambda r, c: (c, 0)),  # h2 cols (sample, dir 1)
        ],
        out_specs=pl.BlockSpec((tm, 1), lambda r, c: (r, 0)),
        scratch_shapes=[pltpu.VMEM((tm, 1), jnp.float32),
                        pltpu.VMEM((tm, 1), jnp.float32)],
        compiler_params=pltpu.CompilerParams(
            dimension_semantics=("parallel", "arbitrary"),
            vmem_limit_bytes=vmem_limit,
        ),
        cost_estimate=cost,
    )(a1, a2, a1, a2)

    # 0.5 * (l1 + l2) = 0.5 * mean_i(lse1_i + lse2_i) - mean_i(diag_i)
    return 0.5 * jnp.mean(lse_sum) - diag_mean


def _reference(h1, h2, tau=TAU):
    """Pure-JAX reference of the same forward (for correctness check)."""
    def normalize(x):
        x = x.astype(jnp.float32)
        return x / jnp.maximum(jnp.linalg.norm(x, axis=-1, keepdims=True), _EPS)

    def infonce(anchor, sample):
        a, s = normalize(anchor), normalize(sample)
        sim = jnp.einsum("id,jd->ij", a, s, precision=lax.Precision.HIGHEST) / tau
        logp = sim - jax.scipy.special.logsumexp(sim, axis=1, keepdims=True)
        return -jnp.mean(jnp.diagonal(logp))

    return 0.5 * (infonce(h1, h2) + infonce(h2, h1))


if __name__ == "__main__":
    key = jax.random.PRNGKey(0)
    k1, k2, k3, k4 = jax.random.split(key, 4)

    # Small shape consistent with the module: 8 embeddings, hidden dim 32.
    N, D = 8, 32
    h1 = jax.random.normal(k1, (N, D), dtype=jnp.float32)
    h2 = jax.random.normal(k2, (N, D), dtype=jnp.float32)
    ref = _reference(h1, h2)

    out_f32 = jax.block_until_ready(yate_contrast_cl(h1, h2, use_bf16_matmul=False))
    assert jnp.isfinite(out_f32), "non-finite loss (f32 path)"
    assert jnp.allclose(out_f32, ref, rtol=1e-2, atol=1e-2), (out_f32, ref)

    out_fast = jax.block_until_ready(yate_contrast_cl(h1, h2))  # default bf16 MXU path
    assert jnp.isfinite(out_fast), "non-finite loss (bf16 path)"
    assert jnp.allclose(out_fast, ref, rtol=3e-2, atol=3e-2), (out_fast, ref)

    # Second shape exercising multi-block tiling + partial edge blocks on both axes.
    N2, D2 = 200, 64
    g1 = jax.random.normal(k3, (N2, D2), dtype=jnp.float32)
    g2 = jax.random.normal(k4, (N2, D2), dtype=jnp.float32)
    ref2 = _reference(g1, g2)

    out2_f32 = jax.block_until_ready(yate_contrast_cl(g1, g2, use_bf16_matmul=False))
    assert jnp.isfinite(out2_f32), "non-finite loss (tiled f32 path)"
    assert jnp.allclose(out2_f32, ref2, rtol=1e-2, atol=1e-2), (out2_f32, ref2)

    out2_fast = jax.block_until_ready(yate_contrast_cl(g1, g2))
    assert jnp.isfinite(out2_fast), "non-finite loss (tiled bf16 path)"
    assert jnp.allclose(out2_fast, ref2, rtol=3e-2, atol=3e-2), (out2_fast, ref2)

    print("KERNEL_OK")
</pallas_src>

<mosaic_0001>
module attributes {stable_mosaic.version = 11 : i64} {
  func.func @kernel(%arg0: i32, %arg1: i32, %arg2: memref<8x32xf32, #tpu.memory_space<vmem>>, %arg3: memref<8x32xf32, #tpu.memory_space<vmem>>, %arg4: memref<8x32xf32, #tpu.memory_space<vmem>>, %arg5: memref<8x32xf32, #tpu.memory_space<vmem>>, %arg6: memref<8x1xf32, #tpu.memory_space<vmem>>, %arg7: memref<8x1xf32, #tpu.memory_space<vmem>>, %arg8: memref<8x1xf32, #tpu.memory_space<vmem>>) attributes {dimension_semantics = [#tpu.dimension_semantics<parallel>, #tpu.dimension_semantics<arbitrary>], iteration_bounds = array<i64: 1, 1>, scalar_prefetch = 0 : i64, scratch_operands = 2 : i64, tpu.core_type = #tpu.core_type<tc>, window_params = [{transform_indices = @transform_0, window_bounds = array<i64: 8, 32>}, {transform_indices = @transform_1, window_bounds = array<i64: 8, 32>}, {transform_indices = @transform_2, window_bounds = array<i64: 8, 32>}, {transform_indices = @transform_3, window_bounds = array<i64: 8, 32>}, {transform_indices = @transform_4, window_bounds = array<i64: 8, 1>}]} {
    %c0_i32 = arith.constant 0 : i32
    %0 = arith.cmpi eq, %arg1, %c0_i32 : i32
    %1 = arith.extui %0 : i1 to i32
    %c0_i32_0 = arith.constant 0 : i32
    %2 = arith.cmpi ne, %1, %c0_i32_0 : i32
    scf.if %2 {
      %cst_21 = arith.constant 0.000000e+00 : f32
      %24 = vector.broadcast %cst_21 : f32 to vector<8x1xf32>
      %c0_22 = arith.constant 0 : index
      %c0_23 = arith.constant 0 : index
      %25 = vector.load %arg7[%c0_22, %c0_23] : memref<8x1xf32, #tpu.memory_space<vmem>>, vector<8x1xf32>
      tpu.vector_store %arg7[%c0_22, %c0_23], %24 {strides = array<i32>} : memref<8x1xf32, #tpu.memory_space<vmem>>, vector<8x1xf32>,
      %cst_24 = arith.constant 0.000000e+00 : f32
      %26 = vector.broadcast %cst_24 : f32 to vector<8x1xf32>
      %c0_25 = arith.constant 0 : index
      %c0_26 = arith.constant 0 : index
      %27 = vector.load %arg8[%c0_25, %c0_26] : memref<8x1xf32, #tpu.memory_space<vmem>>, vector<8x1xf32>
      tpu.vector_store %arg8[%c0_25, %c0_26], %26 {strides = array<i32>} : memref<8x1xf32, #tpu.memory_space<vmem>>, vector<8x1xf32>,
    } else {
    }
    %c0 = arith.constant 0 : index
    %c0_1 = arith.constant 0 : index
    %3 = vector.load %arg2[%c0, %c0_1] : memref<8x32xf32, #tpu.memory_space<vmem>>, vector<8x32xf32>
    %c0_2 = arith.constant 0 : index
    %c0_3 = arith.constant 0 : index
    %4 = vector.load %arg5[%c0_2, %c0_3] : memref<8x32xf32, #tpu.memory_space<vmem>>, vector<8x32xf32>
    %cst = arith.constant dense<0.000000e+00> : vector<8x8xf32>
    %5 = tpu.matmul %3, %4, %cst {dimension_numbers = #tpu.dot_dimension_numbers<[1], [1], [0], [0], [0, 0, 1, 0], [], []>} : vector<8x32xf32>, vector<8x32xf32>, vector<8x8xf32> -> vector<8x8xf32>
    %6 = math.exp %5 : vector<8x8xf32>
    %c0_4 = arith.constant 0 : index
    %c0_5 = arith.constant 0 : index
    %7 = vector.load %arg7[%c0_4, %c0_5] : memref<8x1xf32, #tpu.memory_space<vmem>>, vector<8x1xf32>
    %cst_6 = arith.constant dense<0.000000e+00> : vector<8xf32>
    %8 = vector.multi_reduction <add>, %6, %cst_6 [1] : vector<8x8xf32> to vector<8xf32>
    %9 = vector.shape_cast %8 : vector<8xf32> to vector<8x1xf32>
    %10 = arith.addf %7, %9 : vector<8x1xf32>
    %c0_7 = arith.constant 0 : index
    %c0_8 = arith.constant 0 : index
    %11 = vector.load %arg7[%c0_7, %c0_8] : memref<8x1xf32, #tpu.memory_space<vmem>>, vector<8x1xf32>
    tpu.vector_store %arg7[%c0_7, %c0_8], %10 {strides = array<i32>} : memref<8x1xf32, #tpu.memory_space<vmem>>, vector<8x1xf32>,
    %c0_9 = arith.constant 0 : index
    %c0_10 = arith.constant 0 : index
    %12 = vector.load %arg3[%c0_9, %c0_10] : memref<8x32xf32, #tpu.memory_space<vmem>>, vector<8x32xf32>
    %c0_11 = arith.constant 0 : index
    %c0_12 = arith.constant 0 : index
    %13 = vector.load %arg4[%c0_11, %c0_12] : memref<8x32xf32, #tpu.memory_space<vmem>>, vector<8x32xf32>
    %cst_13 = arith.constant dense<0.000000e+00> : vector<8x8xf32>
    %14 = tpu.matmul %12, %13, %cst_13 {dimension_numbers = #tpu.dot_dimension_numbers<[1], [1], [0], [0], [0, 0, 1, 0], [], []>} : vector<8x32xf32>, vector<8x32xf32>, vector<8x8xf32> -> vector<8x8xf32>
    %15 = math.exp %14 : vector<8x8xf32>
    %c0_14 = arith.constant 0 : index
    %c0_15 = arith.constant 0 : index
    %16 = vector.load %arg8[%c0_14, %c0_15] : memref<8x1xf32, #tpu.memory_space<vmem>>, vector<8x1xf32>
    %cst_16 = arith.constant dense<0.000000e+00> : vector<8xf32>
    %17 = vector.multi_reduction <add>, %15, %cst_16 [1] : vector<8x8xf32> to vector<8xf32>
    %18 = vector.shape_cast %17 : vector<8xf32> to vector<8x1xf32>
    %19 = arith.addf %16, %18 : vector<8x1xf32>
    %c0_17 = arith.constant 0 : index
    %c0_18 = arith.constant 0 : index
    %20 = vector.load %arg8[%c0_17, %c0_18] : memref<8x1xf32, #tpu.memory_space<vmem>>, vector<8x1xf32>
    tpu.vector_store %arg8[%c0_17, %c0_18], %19 {strides = array<i32>} : memref<8x1xf32, #tpu.memory_space<vmem>>, vector<8x1xf32>,
    %c0_i32_19 = arith.constant 0 : i32
    %21 = arith.cmpi eq, %arg1, %c0_i32_19 : i32
    %22 = arith.extui %21 : i1 to i32
    %c0_i32_20 = arith.constant 0 : i32
    %23 = arith.cmpi ne, %22, %c0_i32_20 : i32
    scf.if %23 {
      %c0_21 = arith.constant 0 : index
      %c0_22 = arith.constant 0 : index
      %24 = vector.load %arg7[%c0_21, %c0_22] : memref<8x1xf32, #tpu.memory_space<vmem>>, vector<8x1xf32>
      %25 = math.log %24 : vector<8x1xf32>
      %c0_23 = arith.constant 0 : index
      %c0_24 = arith.constant 0 : index
      %26 = vector.load %arg8[%c0_23, %c0_24] : memref<8x1xf32, #tpu.memory_space<vmem>>, vector<8x1xf32>
      %27 = math.log %26 : vector<8x1xf32>
      %28 = arith.addf %25, %27 : vector<8x1xf32>
      %c0_25 = arith.constant 0 : index
      %c0_26 = arith.constant 0 : index
      %29 = vector.load %arg6[%c0_25, %c0_26] : memref<8x1xf32, #tpu.memory_space<vmem>>, vector<8x1xf32>
      tpu.vector_store %arg6[%c0_25, %c0_26], %28 {strides = array<i32>} : memref<8x1xf32, #tpu.memory_space<vmem>>, vector<8x1xf32>,
    } else {
    }
    return
  }
  func.func @transform_0(%arg0: i32, %arg1: i32) -> (i32, i32) {
    %c0_i32 = arith.constant 0 : i32
    %c0_i32_0 = arith.constant 0 : i32
    return %arg0, %c0_i32 : i32, i32
  }
  func.func @transform_1(%arg0: i32, %arg1: i32) -> (i32, i32) {
    %c0_i32 = arith.constant 0 : i32
    %c0_i32_0 = arith.constant 0 : i32
    return %arg0, %c0_i32 : i32, i32
  }
  func.func @transform_2(%arg0: i32, %arg1: i32) -> (i32, i32) {
    %c0_i32 = arith.constant 0 : i32
    %c0_i32_0 = arith.constant 0 : i32
    return %arg1, %c0_i32 : i32, i32
  }
  func.func @transform_3(%arg0: i32, %arg1: i32) -> (i32, i32) {
    %c0_i32 = arith.constant 0 : i32
    %c0_i32_0 = arith.constant 0 : i32
    return %arg1, %c0_i32 : i32, i32
  }
  func.func @transform_4(%arg0: i32, %arg1: i32) -> (i32, i32) {
    %c0_i32 = arith.constant 0 : i32
    %c0_i32_0 = arith.constant 0 : i32
    return %arg0, %c0_i32 : i32, i32
  }
}

</mosaic_0001>

<llo_original>
// kernel: tpu_custom_call.1
$region0: #{tpu_custom_call.1}
  #allocation0 [shape = 'u32[]', space=smem, size = 0x4, offset = 0x4, fixed_abs, tag = 'smem constant byte address 0x4 - core index']
  #allocation1 [shape = 'u32[144,128]{1,0:T(1,128)}', space=vmem, size = 0x12000, scoped, tag = 'internal scratch']
  #allocation2 [shape = 'f32[8,1]{1,0:T(8,128)}', space=vmem, size = 0x1000, scoped, tag = 'scratch operand']
  #allocation3 [shape = 'f32[8,1]{1,0:T(8,128)}', space=vmem, size = 0x1000, scoped, tag = 'scratch operand']
  %s0 = inlined_call_operand.hbm [shape: f32[8,32], index: 0, kind: input, shape index: {}]
  %s1 = inlined_call_operand.hbm [shape: f32[8,32], index: 1, kind: input, shape index: {}]
  %s2 = inlined_call_operand.hbm [shape: f32[8,32], index: 2, kind: input, shape index: {}]
  %s3 = inlined_call_operand.hbm [shape: f32[8,32], index: 3, kind: input, shape index: {}]
  %s4 = inlined_call_operand.vmem [shape: f32[8,1], index: 4, kind: output, shape index: {}]
  %s5 = sld [smem:[#allocation0]]
  $region50: #{tpu_custom_call.1} parent=0
    _
  %s7 = ssub.s32 1, %s5
  %s8 = scalar_select 0, %s7, %s5
  $region1: #{tpu_custom_call.1} parent=0
    #allocation4 [shape = 'u8[4096]{0}', space=vmem, size = 0x1000, scoped, tag = 'input window, operand 0, single buffered']
    #allocation5 [shape = 's32[1]{0}', space=sflag, size = 0x4, scoped, tag = 'scoped memory for tpu_custom_call.1']
    #allocation6 [shape = 'u8[4096]{0}', space=vmem, size = 0x1000, scoped, tag = 'input window, operand 1, single buffered']
    #allocation7 [shape = 's32[1]{0}', space=sflag, size = 0x4, scoped, tag = 'scoped memory for tpu_custom_call.1']
    #allocation8 [shape = 'u8[4096]{0}', space=vmem, size = 0x1000, scoped, tag = 'input window, operand 2, single buffered']
    #allocation9 [shape = 'u8[4096]{0}', space=vmem, size = 0x1000, scoped, tag = 'input window, operand 3, single buffered']
    #allocation10 [shape = 's32[1]{0}', space=sflag, size = 0x4, scoped, tag = 'scoped memory for tpu_custom_call.1']
    %9 = vsyncpa [#allocation5], 0
    %10 = vsyncpa [#allocation7], 0
    %11 = vsyncpa [#allocation10], 0
    // Predicated region
    $region2: #{tpu_custom_call.1} parent=1 // pred_check
      _
    $region3: #{tpu_custom_call.1} parent=1 // pred_check_branch
      %13 = sbr.rel (0) target = $region5
    $region4: #{tpu_custom_call.1} parent=1 // pred_region
      %s15 = ssub.s32 128, 128
      %16 = vsyncadd [#allocation5], %s15
      %s18 = sshll.u32 [#allocation4], 4
      %s19 = int_to_ptr.vmem [resolvable:$true] %s18
      %21 = dma.hbm_to_vmem [thread:$0]  %s0, 128, %s19, [#allocation5]
    $region5: #{tpu_custom_call.1} parent=1 // pred_fallthru
      _
    // Predicated region
    $region6: #{tpu_custom_call.1} parent=1 // pred_check
      _
    $region7: #{tpu_custom_call.1} parent=1 // pred_check_branch
      %23 = sbr.rel (0) target = $region9
    $region8: #{tpu_custom_call.1} parent=1 // pred_region
      %s25 = ssub.s32 128, 128
      %26 = vsyncadd [#allocation7], %s25
      %s28 = sshll.u32 [#allocation6], 4
      %s29 = int_to_ptr.vmem [resolvable:$true] %s28
      %31 = dma.hbm_to_vmem [thread:$0]  %s1, 128, %s29, [#allocation7]
    $region9: #{tpu_custom_call.1} parent=1 // pred_fallthru
      _
    // Predicated region
    $region10: #{tpu_custom_call.1} parent=1 // pred_check
      _
    $region11: #{tpu_custom_call.1} parent=1 // pred_check_branch
      %33 = sbr.rel (0) target = $region13
    $region12: #{tpu_custom_call.1} parent=1 // pred_region
      %s35 = ssub.s32 128, 128
      %36 = vsyncadd [#allocation7], %s35
      %s38 = sshll.u32 [#allocation8], 4
      %s39 = int_to_ptr.vmem [resolvable:$true] %s38
      %41 = dma.hbm_to_vmem [thread:$0]  %s2, 128, %s39, [#allocation7]
    $region13: #{tpu_custom_call.1} parent=1 // pred_fallthru
      _
    // Predicated region
    $region14: #{tpu_custom_call.1} parent=1 // pred_check
      _
    $region15: #{tpu_custom_call.1} parent=1 // pred_check_branch
      %43 = sbr.rel (0) target = $region17
    $region16: #{tpu_custom_call.1} parent=1 // pred_region
      %s45 = ssub.s32 128, 128
      %46 = vsyncadd [#allocation10], %s45
      %s48 = sshll.u32 [#allocation9], 4
      %s49 = int_to_ptr.vmem [resolvable:$true] %s48
      %51 = dma.hbm_to_vmem [thread:$0]  %s3, 128, %s49, [#allocation10]
    $region17: #{tpu_custom_call.1} parent=1 // pred_fallthru
      _
    // Predicated region
    $region18: #{tpu_custom_call.1} parent=1 // pred_check
      _
    $region19: #{tpu_custom_call.1} parent=1 // pred_check_branch
      %53 = sbr.rel (0) target = $region21
    $region20: #{tpu_custom_call.1} parent=1 // pred_region
      %54 = dma.done [#allocation5], 128
    $region21: #{tpu_custom_call.1} parent=1 // pred_fallthru
      _
    // Predicated region
    $region22: #{tpu_custom_call.1} parent=1 // pred_check
      _
    $region23: #{tpu_custom_call.1} parent=1 // pred_check_branch
      %56 = sbr.rel (0) target = $region25
    $region24: #{tpu_custom_call.1} parent=1 // pred_region
      %57 = dma.done [#allocation7], 128
    $region25: #{tpu_custom_call.1} parent=1 // pred_fallthru
      _
    // Predicated region
    $region26: #{tpu_custom_call.1} parent=1 // pred_check
      _
    $region27: #{tpu_custom_call.1} parent=1 // pred_check_branch
      %59 = sbr.rel (0) target = $region29
    $region28: #{tpu_custom_call.1} parent=1 // pred_region
      %60 = dma.done [#allocation7], 128
    $region29: #{tpu_custom_call.1} parent=1 // pred_fallthru
      _
    // Predicated region
    $region30: #{tpu_custom_call.1} parent=1 // pred_check
      _
    $region31: #{tpu_custom_call.1} parent=1 // pred_check_branch
      %62 = sbr.rel (0) target = $region33
    $region32: #{tpu_custom_call.1} parent=1 // pred_region
      %63 = dma.done [#allocation10], 128
    $region33: #{tpu_custom_call.1} parent=1 // pred_fallthru
      _
    %p64 = scmp.eq.s32.totalorder 0, 0
    // Predicated region
    $region34: #{tpu_custom_call.1} parent=1 // pred_check
      %p65 = pneg %p64
    $region35: #{tpu_custom_call.1} parent=1 // pred_check_branch
      %67 = sbr.rel (%p65) target = $region37
    $region36: #{tpu_custom_call.1} parent=1 // pred_region
      %vm68 = vcmask 7168
      %69 = vst.msk [vmem:[#allocation2] sm:$0xff] %vm68, 0.0
      %70 = vst.msk [vmem:[#allocation3] sm:$0xff] %vm68, 0.0
    $region37: #{tpu_custom_call.1} parent=1 // pred_fallthru
      _
    %v71 = vld [vmem:[#allocation4] sm:$0xff]
    %v72 = vld [vmem:[#allocation9] sm:$0xff]
    %vm73 = vcmask 261120
    %v75 = vsel %vm73, %v71, 0
    %v78 = vsel %vm73, %v72, 0
    %80 = vmatprep.subr.mxu0 0.0
    %81 = vmatpush1.xpose.msra.mxu0 0.0
    %82 = vmatprep.subr.mxu0 0.0
    %83 = vmatpush1.xpose.msra.mxu0 0.0
    %84 = vmatprep.subr.mxu0 0.0
    %85 = vmatpush1.xpose.msra.mxu0 0.0
    %86 = vmatprep.subr.mxu0 0.0
    %87 = vmatpush1.xpose.msra.mxu0 0.0
    %88 = vmatprep.subr.mxu0 0.0
    %89 = vmatpush1.xpose.msra.mxu0 0.0
    %90 = vmatprep.subr.mxu0 0.0
    %91 = vmatpush1.xpose.msra.mxu0 0.0
    %92 = vmatprep.subr.mxu0 0.0
    %93 = vmatpush1.xpose.msra.mxu0 0.0
    %94 = vmatprep.subr.mxu0 0.0
    %95 = vmatpush1.xpose.msra.mxu0 0.0
    %96 = vmatprep.subr.mxu0 0.0
    %97 = vmatpush1.xpose.msra.mxu0 0.0
    %98 = vmatprep.subr.mxu0 0.0
    %99 = vmatpush1.xpose.msra.mxu0 0.0
    %100 = vmatprep.subr.mxu0 0.0
    %101 = vmatpush1.xpose.msra.mxu0 0.0
    %102 = vmatprep.subr.mxu0 0.0
    %103 = vmatpush1.xpose.msra.mxu0 0.0
    %104 = vmatprep.subr.mxu0 0.0
    %105 = vmatpush1.xpose.msra.mxu0 0.0
    %106 = vmatprep.subr.mxu0 0.0
    %107 = vmatpush1.xpose.msra.mxu0 0.0
    %108 = vmatprep.subr.mxu0 0.0
    %109 = vmatpush1.xpose.msra.mxu0 0.0
    %110 = vmatprep.subr.mxu0 0.0
    %111 = vmatpush1.xpose.msra.mxu0 %v78
    %112 = vmatprep.subr.mxu0 0.0
    %113 = vmatpush2.xpose.msra.mxu0 0.0
    %114 = vmatprep.subr.mxu0 0.0
    %115 = vmatpush2.xpose.msra.mxu0 0.0
    %116 = vmatprep.subr.mxu0 0.0
    %117 = vmatpush2.xpose.msra.mxu0 0.0
    %118 = vmatprep.subr.mxu0 0.0
    %119 = vmatpush2.xpose.msra.mxu0 0.0
    %120 = vmatprep.subr.mxu0 0.0
    %121 = vmatpush2.xpose.msra.mxu0 0.0
    %122 = vmatprep.subr.mxu0 0.0
    %123 = vmatpush2.xpose.msra.mxu0 0.0
    %124 = vmatprep.subr.mxu0 0.0
    %125 = vmatpush2.xpose.msra.mxu0 0.0
    %126 = vmatprep.subr.mxu0 0.0
    %127 = vmatpush2.xpose.msra.mxu0 0.0
    %128 = vmatprep.subr.mxu0 0.0
    %129 = vmatpush2.xpose.msra.mxu0 0.0
    %130 = vmatprep.subr.mxu0 0.0
    %131 = vmatpush2.xpose.msra.mxu0 0.0
    %132 = vmatprep.subr.mxu0 0.0
    %133 = vmatpush2.xpose.msra.mxu0 0.0
    %134 = vmatprep.subr.mxu0 0.0
    %135 = vmatpush2.xpose.msra.mxu0 0.0
    %136 = vmatprep.subr.mxu0 0.0
    %137 = vmatpush2.xpose.msra.mxu0 0.0
    %138 = vmatprep.subr.mxu0 0.0
    %139 = vmatpush2.xpose.msra.mxu0 0.0
    %140 = vmatprep.subr.mxu0 0.0
    %141 = vmatpush2.xpose.msra.mxu0 0.0
    %142 = vmatprep.subr.mxu0 0.0
    %143 = vmatpush2.xpose.msra.mxu0 0.0
    %144 = vmatprep.mubr.f32.mxu0 0.0
    %145 = vmatmul.mubr.f32.gmra.mxu0 %v75
    %v146 = vpop.f32.mrf.mxu0
    %v147 = vadd.f32 0.0, %v146
    %v148 = vpop.f32.mrf.mxu0
    %149 = vdwg.mxu0
    %v150 = vmul.f32 %v147, 1.442695
    %v151 = vpow.pop %v150
    %v152 = vld [vmem:[#allocation2] sm:$0xff]
    %vm153 = vcmask 64512
    %v154 = vsel %vm153, %v151, 0.0
    %155 = vadd.xlane.f32.xlu0 %v154
    %v156 = vpop.xlane.xlu0 %155
    %v157 = vadd.f32 %v152, %v156
    %vm158 = vcmask 7168
    %159 = vst.msk [vmem:[#allocation2] sm:$0xff] %vm158, %v157
    %v160 = vld [vmem:[#allocation6] sm:$0xff]
    %v161 = vld [vmem:[#allocation8] sm:$0xff]
    %v163 = vsel %vm73, %v160, 0
    %v166 = vsel %vm73, %v161, 0
    %168 = vmatprep.subr.mxu0 0.0
    %169 = vmatpush1.xpose.msra.mxu0 0.0
    %170 = vmatprep.subr.mxu0 0.0
    %171 = vmatpush1.xpose.msra.mxu0 0.0
    %172 = vmatprep.subr.mxu0 0.0
    %173 = vmatpush1.xpose.msra.mxu0 0.0
    %174 = vmatprep.subr.mxu0 0.0
    %175 = vmatpush1.xpose.msra.mxu0 0.0
    %176 = vmatprep.subr.mxu0 0.0
    %177 = vmatpush1.xpose.msra.mxu0 0.0
    %178 = vmatprep.subr.mxu0 0.0
    %179 = vmatpush1.xpose.msra.mxu0 0.0
    %180 = vmatprep.subr.mxu0 0.0
    %181 = vmatpush1.xpose.msra.mxu0 0.0
    %182 = vmatprep.subr.mxu0 0.0
    %183 = vmatpush1.xpose.msra.mxu0 0.0
    %184 = vmatprep.subr.mxu0 0.0
    %185 = vmatpush1.xpose.msra.mxu0 0.0
    %186 = vmatprep.subr.mxu0 0.0
    %187 = vmatpush1.xpose.msra.mxu0 0.0
    %188 = vmatprep.subr.mxu0 0.0
    %189 = vmatpush1.xpose.msra.mxu0 0.0
    %190 = vmatprep.subr.mxu0 0.0
    %191 = vmatpush1.xpose.msra.mxu0 0.0
    %192 = vmatprep.subr.mxu0 0.0
    %193 = vmatpush1.xpose.msra.mxu0 0.0
    %194 = vmatprep.subr.mxu0 0.0
    %195 = vmatpush1.xpose.msra.mxu0 0.0
    %196 = vmatprep.subr.mxu0 0.0
    %197 = vmatpush1.xpose.msra.mxu0 0.0
    %198 = vmatprep.subr.mxu0 0.0
    %199 = vmatpush1.xpose.msra.mxu0 %v166
    %200 = vmatprep.subr.mxu0 0.0
    %201 = vmatpush2.xpose.msra.mxu0 0.0
    %202 = vmatprep.subr.mxu0 0.0
    %203 = vmatpush2.xpose.msra.mxu0 0.0
    %204 = vmatprep.subr.mxu0 0.0
    %205 = vmatpush2.xpose.msra.mxu0 0.0
    %206 = vmatprep.subr.mxu0 0.0
    %207 = vmatpush2.xpose.msra.mxu0 0.0
    %208 = vmatprep.subr.mxu0 0.0
    %209 = vmatpush2.xpose.msra.mxu0 0.0
    %210 = vmatprep.subr.mxu0 0.0
    %211 = vmatpush2.xpose.msra.mxu0 0.0
    %212 = vmatprep.subr.mxu0 0.0
    %213 = vmatpush2.xpose.msra.mxu0 0.0
    %214 = vmatprep.subr.mxu0 0.0
    %215 = vmatpush2.xpose.msra.mxu0 0.0
    %216 = vmatprep.subr.mxu0 0.0
    %217 = vmatpush2.xpose.msra.mxu0 0.0
    %218 = vmatprep.subr.mxu0 0.0
    %219 = vmatpush2.xpose.msra.mxu0 0.0
    %220 = vmatprep.subr.mxu0 0.0
    %221 = vmatpush2.xpose.msra.mxu0 0.0
    %222 = vmatprep.subr.mxu0 0.0
    %223 = vmatpush2.xpose.msra.mxu0 0.0
    %224 = vmatprep.subr.mxu0 0.0
    %225 = vmatpush2.xpose.msra.mxu0 0.0
    %226 = vmatprep.subr.mxu0 0.0
    %227 = vmatpush2.xpose.msra.mxu0 0.0
    %228 = vmatprep.subr.mxu0 0.0
    %229 = vmatpush2.xpose.msra.mxu0 0.0
    %230 = vmatprep.subr.mxu0 0.0
    %231 = vmatpush2.xpose.msra.mxu0 0.0
    %232 = vmatprep.mubr.f32.mxu0 0.0
    %233 = vmatmul.mubr.f32.gmra.mxu0 %v163
    %v234 = vpop.f32.mrf.mxu0
    %v235 = vadd.f32 0.0, %v234
    %v236 = vpop.f32.mrf.mxu0
    %237 = vdwg.mxu0
    %v238 = vmul.f32 %v235, 1.442695
    %v239 = vpow.pop %v238
    %v240 = vld [vmem:[#allocation3] sm:$0xff]
    %v241 = vsel %vm153, %v239, 0.0
    %242 = vadd.xlane.f32.xlu0 %v241
    %v243 = vpop.xlane.xlu0 %242
    %v244 = vadd.f32 %v240, %v243
    %245 = vst.msk [vmem:[#allocation3] sm:$0xff] %vm158, %v244
    // Predicated region
    $region38: #{tpu_custom_call.1} parent=1 // pred_check
      %p246 = pneg %p64
    $region39: #{tpu_custom_call.1} parent=1 // pred_check_branch
      %248 = sbr.rel (%p246) target = $region41
    $region40: #{tpu_custom_call.1} parent=1 // pred_region
      %v249 = vld [vmem:[#allocation2] sm:$0xff]
      %v250 = vlog2.pop %v249
      %v251 = vmul.f32 %v250, 0.6931472
      %v252 = vld [vmem:[#allocation3] sm:$0xff]
      %v253 = vlog2.pop %v252
      %v254 = vmul.f32 %v253, 0.6931472
      %v255 = vadd.f32 %v251, %v254
      %256 = vst.msk [vmem:[%s4] sm:$0xff] %vm158, %v255
    $region41: #{tpu_custom_call.1} parent=1 // pred_fallthru
      _
    // Predicated region
    $region42: #{tpu_custom_call.1} parent=1 // pred_check
      _
    $region43: #{tpu_custom_call.1} parent=1 // pred_check_branch
      %258 = sbr.rel (0) target = $region45
    $region44: #{tpu_custom_call.1} parent=1 // pred_region
      _
    $region45: #{tpu_custom_call.1} parent=1 // pred_fallthru
      _
    // Predicated region
    $region46: #{tpu_custom_call.1} parent=1 // pred_check
      _
    $region47: #{tpu_custom_call.1} parent=1 // pred_check_branch
      %260 = sbr.rel (0) target = $region49
    $region48: #{tpu_custom_call.1} parent=1 // pred_region
      _
    $region49: #{tpu_custom_call.1} parent=1 // pred_fallthru
      _
    %261 = vsyncpa [#allocation5], 1
    %262 = vsyncpa [#allocation7], 1
    %263 = vsyncpa [#allocation10], 1

</llo_original>
